<compile_context>
chip_gen: v6e
topology: v6e:2x2x1
jax: 0.10.0
libtpu: 0.0.40
codegen_flags: <defaults>
</compile_context>

<pallas_src>
import functools
import jax
import jax.numpy as jnp
from jax.experimental import pallas as pl
from jax.experimental.pallas import tpu as pltpu


def _round_up(x, m):
    return (x + m - 1) // m * m


# ----------------------------------------------------------------------------
# Generation-aware VMEM budget.
# ----------------------------------------------------------------------------
def _vmem_capacity_bytes():
    try:
        info = pltpu.get_tpu_info()
        cap = getattr(info, "vmem_capacity_bytes", None)
        if cap:
            return int(cap)
    except Exception:
        pass
    return 64 * 1024 * 1024   # v7x-conservative fallback


_MIB = 1024 * 1024
_VMEM_CAP = _vmem_capacity_bytes()                       # 128 MiB v5e/v6e, 64 MiB v7x
_VMEM_LIMIT = max(32 * _MIB, min(_VMEM_CAP - 16 * _MIB, 64 * _MIB))
_VMEM_BUDGET = max(16 * _MIB, min(_VMEM_LIMIT - 16 * _MIB, 40 * _MIB))


# ----------------------------------------------------------------------------
# Pallas kernels: tiled matmul with fused bias add and optional ReLU.
# bf16 inputs streamed from HBM, f32 accumulation.
# ----------------------------------------------------------------------------
def _matmul_kernel_single(x_ref, w_ref, b_ref, o_ref, *, relu):
    # Full K in one tile: no accumulator scratch, no init/finalize pl.when.
    out = jnp.dot(x_ref[...], w_ref[...],
                  preferred_element_type=jnp.float32) + b_ref[...]
    if relu:
        out = jnp.maximum(out, 0.0)
    o_ref[...] = out.astype(o_ref.dtype)


def _matmul_kernel_acc(x_ref, w_ref, b_ref, o_ref, acc_ref, *, relu):
    @pl.when(pl.program_id(2) == 0)
    def _():
        acc_ref[...] = jnp.zeros_like(acc_ref)

    acc_ref[...] += jnp.dot(x_ref[...], w_ref[...],
                            preferred_element_type=jnp.float32)

    @pl.when(pl.program_id(2) == pl.num_programs(2) - 1)
    def _():
        out = acc_ref[...] + b_ref[...]
        if relu:
            out = jnp.maximum(out, 0.0)
        o_ref[...] = out.astype(o_ref.dtype)


# ----------------------------------------------------------------------------
# Tile selection (Python ints, done once at prep time).
# ----------------------------------------------------------------------------
def _choose_tn(N, single_m_block):
    """Largest lane-aligned tn with <=12.5% extra N padding; keep >=2 N blocks
    (megacore) when the M grid axis has a single block. 768 allows an even
    2-way split of the fused-heads matmul (N padded 1287 -> 1536)."""
    N128 = _round_up(N, 128)
    for cand in (1024, 768, 512, 384, 256, 128):
        if cand > N128:
            continue
        Np = _round_up(N128, cand)
        if (Np - N128) * 8 > N128:                 # too much extra padding
            continue
        if single_m_block and (Np // cand) < 2 and N128 > 128:
            continue
        return cand
    return N128


def _choose_tk(K, tm, tn, budget):
    """Single k-step if it fits the VMEM budget; else largest divisor of the
    padded K (minimal padding) that fits."""
    K128 = _round_up(K, 128)
    lanes = K128 // 128
    per_lane = 512 * (tm + tn)                     # dbl-buffered bf16 x & w per 128 of K
    fixed = 8 * tn + 12 * tm * tn                  # bias + dbl-buffered out + f32 acc
    max_lanes = max(1, (budget - fixed) // per_lane)
    if lanes <= max_lanes:
        return K128
    best = 1
    for d in range(1, int(min(lanes, max_lanes)) + 1):
        if lanes % d == 0:
            best = d
    if best * 2 < max_lanes:                       # divisor too small -> accept K padding
        best = int(max_lanes)
    return best * 128


def _choose_tiles(K, N, m_hint, budget):
    Mh = _round_up(max(m_hint, 1), 8)
    K128 = _round_up(K, 128)
    N128 = _round_up(N, 128)
    if Mh <= 512:
        # FC-style layer (or small conv): single M block, split N for megacore.
        tm = Mh
        tn = _choose_tn(N, single_m_block=True)
        tk = _choose_tk(K, tm, tn, budget)
    else:
        # Large-M (conv im2col) path: K and N are small -> take them whole and
        # spend leftover VMEM on tm so the grid has only a few big steps.
        tn = N128 if N128 <= 512 else _choose_tn(N, False)
        tk = K128
        fixed = 4 * tk * tn + 8 * tn               # dbl-buffered bf16 weight + bias
        per_row = 4 * tk + 8 * tn                  # dbl bf16 x row + dbl f32 out row
        tm_max = max(8, (budget - fixed) // per_row // 8 * 8)
        tm = max(8, min(tm_max, 3072, Mh))
        n_blocks = max(1, _round_up(N128, tn) // tn)
        if _round_up(Mh, tm) == tm and n_blocks < 2 and Mh > 8:
            tm = max(8, _round_up((Mh + 1) // 2, 8))   # keep >=2 M blocks (megacore)
    return tm, tk, tn


# ----------------------------------------------------------------------------
# Linear layer: prep (cast/pad/pre-tile weights once) + Pallas matmul apply.
# ----------------------------------------------------------------------------
def prep_linear(w, b, *, m_hint, budget=None):
    """w: (K, N) f32, b: (N,) f32.  One-time: bf16 cast, pad, block-contiguous
    re-layout (gj, gk, tk, tn).  Returns (static_meta, device_consts)."""
    budget = _VMEM_BUDGET if budget is None else budget
    K, N = w.shape
    tm, tk, tn = _choose_tiles(K, N, m_hint, budget)
    Kp = _round_up(_round_up(K, 128), tk)
    Np = _round_up(_round_up(N, 128), tn)
    gj, gk = Np // tn, Kp // tk
    wpad = jnp.pad(w.astype(jnp.bfloat16), ((0, Kp - K), (0, Np - N)))
    # (Kp, Np) -> (gj, gk, tk, tn): each (tk, tn) weight block is contiguous in HBM.
    wblk = jnp.transpose(wpad.reshape(gk, tk, gj, tn), (2, 0, 1, 3))
    bp = jnp.pad(b.astype(jnp.float32), ((0, Np - N),)).reshape(1, Np)
    meta = {"K": K, "N": N, "tm": tm, "tk": tk, "tn": tn}
    consts = {"wp": wblk, "bp": bp}
    return meta, consts


def apply_linear(meta, consts, x, relu=False, out_dtype=jnp.float32):
    """out = relu?(x @ w + b); bf16 streaming, f32 accumulation."""
    M, K = x.shape
    assert K == meta["K"], (K, meta["K"])
    tm, tk, tn = meta["tm"], meta["tk"], meta["tn"]
    wp, bp = consts["wp"], consts["bp"]
    gj, gk = wp.shape[0], wp.shape[1]
    Kp, Np = gk * tk, gj * tn

    Mp = _round_up(M, tm)
    xp = x if x.dtype == jnp.bfloat16 else x.astype(jnp.bfloat16)
    if Mp != M or Kp != K:
        xp = jnp.pad(xp, ((0, Mp - M), (0, Kp - K)))
    gi = Mp // tm

    cost = pl.CostEstimate(
        flops=2 * Mp * Kp * Np,
        transcendentals=0,
        bytes_accessed=int(wp.size * 2 * gi + xp.size * 2 * gj
                           + Mp * Np * jnp.dtype(out_dtype).itemsize
                           + bp.size * 4),
    )
    out_shape = jax.ShapeDtypeStruct((Mp, Np), out_dtype)

    if gk == 1:
        out = pl.pallas_call(
            functools.partial(_matmul_kernel_single, relu=relu),
            out_shape=out_shape,
            grid_spec=pltpu.PrefetchScalarGridSpec(
                num_scalar_prefetch=0,
                grid=(gi, gj),
                in_specs=[
                    pl.BlockSpec((tm, tk), lambda i, j: (i, 0)),
                    pl.BlockSpec((None, None, tk, tn), lambda i, j: (j, 0, 0, 0)),
                    pl.BlockSpec((1, tn), lambda i, j: (0, j)),
                ],
                out_specs=pl.BlockSpec((tm, tn), lambda i, j: (i, j)),
            ),
            compiler_params=pltpu.CompilerParams(
                dimension_semantics=("parallel", "parallel"),
                vmem_limit_bytes=_VMEM_LIMIT),
            cost_estimate=cost,
        )(xp, wp, bp)
    else:
        out = pl.pallas_call(
            functools.partial(_matmul_kernel_acc, relu=relu),
            out_shape=out_shape,
            grid_spec=pltpu.PrefetchScalarGridSpec(
                num_scalar_prefetch=0,
                grid=(gi, gj, gk),
                in_specs=[
                    pl.BlockSpec((tm, tk), lambda i, j, k: (i, k)),
                    pl.BlockSpec((None, None, tk, tn), lambda i, j, k: (j, k, 0, 0)),
                    pl.BlockSpec((1, tn), lambda i, j, k: (0, j)),
                ],
                out_specs=pl.BlockSpec((tm, tn), lambda i, j, k: (i, j)),
                scratch_shapes=[pltpu.VMEM((tm, tn), jnp.float32)],
            ),
            compiler_params=pltpu.CompilerParams(
                dimension_semantics=("parallel", "parallel", "arbitrary"),
                vmem_limit_bytes=_VMEM_LIMIT),
            cost_estimate=cost,
        )(xp, wp, bp)

    if Mp != M or Np != meta["N"]:
        out = out[:M, :meta["N"]]
    return out


# ----------------------------------------------------------------------------
# Convolution: fused patch extraction (implicit im2col) + Pallas matmul.
# Conv activations stay bf16 end to end.
# ----------------------------------------------------------------------------
def conv2d(meta_c, consts_c, x_nhwc, relu=True):
    B = x_nhwc.shape[0]
    kh, kw = meta_c["kh"], meta_c["kw"]
    s, p = meta_c["stride"], meta_c["pad"]
    # One fused op; patch feature order is C-major then (kh, kw) row-major,
    # matching the (C, kh, kw, O) weight reshape done at prep time.
    patches = jax.lax.conv_general_dilated_patches(
        x_nhwc.astype(jnp.bfloat16),
        filter_shape=(kh, kw),
        window_strides=(s, s),
        padding=((p, p), (p, p)),
        dimension_numbers=("NHWC", "HWIO", "NHWC"),
    )
    _, oh, ow, kk = patches.shape
    cols = patches.reshape(B * oh * ow, kk)
    out = apply_linear(meta_c, consts_c, cols, relu=relu, out_dtype=jnp.bfloat16)
    return out.reshape(B, oh, ow, meta_c["N"])


def maxpool(x, k=3, s=2):
    # small reduction window; lax glue (hot path is the matmuls); bf16 in/out.
    return jax.lax.reduce_window(x, jnp.array(-jnp.inf, dtype=x.dtype),
                                 jax.lax.max, (1, k, k, 1), (1, s, s, 1), "VALID")


# ----------------------------------------------------------------------------
# Parameters (deterministic synthetic init, PyTorch layouts).
# ----------------------------------------------------------------------------
def _init_linear(key, fin, fout):
    w = jax.random.normal(key, (fin, fout), jnp.float32) * (1.0 / jnp.sqrt(fin))
    return w, jnp.zeros((fout,), jnp.float32)


def _init_conv(key, o, c, kh, kw):
    fan_in = c * kh * kw
    w = jax.random.normal(key, (o, c, kh, kw), jnp.float32) * (1.0 / jnp.sqrt(fan_in))
    return w, jnp.zeros((o,), jnp.float32)


def init_params(key, num_classes=7, num_domains=3):
    ks = jax.random.split(key, 16)
    p = {}
    # AlexNet features
    p["conv1"] = _init_conv(ks[0], 64, 3, 11, 11)
    p["conv2"] = _init_conv(ks[1], 192, 64, 5, 5)
    p["conv3"] = _init_conv(ks[2], 384, 192, 3, 3)
    p["conv4"] = _init_conv(ks[3], 256, 384, 3, 3)
    p["conv5"] = _init_conv(ks[4], 256, 256, 3, 3)
    # classifier[:-1] (feature_layers) and final fc
    p["fc1"] = _init_linear(ks[5], 256 * 6 * 6, 4096)
    p["fc2"] = _init_linear(ks[6], 4096, 4096)
    p["fc"] = _init_linear(ks[7], 4096, num_classes)
    # Generator (assumed 4096 -> 4096 MLP)
    p["gen1"] = _init_linear(ks[8], 4096, 4096)
    p["gen2"] = _init_linear(ks[9], 4096, 4096)
    # GDiscriminator [4096, 256, 2]
    p["gd1"] = _init_linear(ks[10], 4096, 256)
    p["gd2"] = _init_linear(ks[11], 256, 2)
    # Discriminator [4096, 1024, 1024, num_domains]
    p["d1"] = _init_linear(ks[12], 4096, 1024)
    p["d2"] = _init_linear(ks[13], 1024, 1024)
    p["d3"] = _init_linear(ks[14], 1024, num_domains)
    return p


def _conv_out_hw(h, k, s, p):
    return (h + 2 * p - k) // s + 1


def prepare_params(params, *, batch, image_hw, num_classes, num_domains):
    """One-time prep: bf16 cast, padding, block-contiguous weight layout,
    tiling metadata, head fusion.  Returns (static meta dict, array dict)."""
    B = batch
    meta = {"num_classes": num_classes, "num_domains": num_domains}
    consts = {}

    def add_linear(name, w, b, m_hint):
        m, c = prep_linear(w, b, m_hint=m_hint)
        meta[name] = m
        consts[name] = c

    def add_conv(name, k, s, p, h_in):
        w, b = params[name]
        O, C, kh, kw = w.shape
        h_out = _conv_out_hw(h_in, k, s, p)
        # torch (O, C, kh, kw) -> matmul weight (C*kh*kw, O), C-major to match
        # conv_general_dilated_patches channel ordering.
        wmat = jnp.transpose(w, (1, 2, 3, 0)).reshape(C * kh * kw, O)
        m, c = prep_linear(wmat, b, m_hint=B * h_out * h_out)
        m.update(kh=kh, kw=kw, stride=s, pad=p)
        meta[name] = m
        consts[name] = c
        return h_out

    h = image_hw
    h = add_conv("conv1", 11, 4, 2, h)       # 224 -> 55
    h = _conv_out_hw(h, 3, 2, 0)             # pool -> 27
    h = add_conv("conv2", 5, 1, 2, h)        # 27
    h = _conv_out_hw(h, 3, 2, 0)             # pool -> 13
    h = add_conv("conv3", 3, 1, 1, h)        # 13
    h = add_conv("conv4", 3, 1, 1, h)        # 13
    h = add_conv("conv5", 3, 1, 1, h)        # 13
    h = _conv_out_hw(h, 3, 2, 0)             # pool -> 6
    assert h == 6, h

    add_linear("fc1", *params["fc1"], m_hint=B)
    add_linear("fc2", *params["fc2"], m_hint=B)
    add_linear("fc", *params["fc"], m_hint=B)            # eval branch
    add_linear("gen1", *params["gen1"], m_hint=B)
    add_linear("gen2", *params["gen2"], m_hint=B)

    # Fused heads: fc | GDiscriminator first layer | Discriminator first layer.
    # All three consume concat_x (2B, 4096); one lane-dense matmul instead of 3.
    w_heads = jnp.concatenate(
        [params["fc"][0], params["gd1"][0], params["d1"][0]], axis=1)
    b_heads = jnp.concatenate(
        [params["fc"][1], params["gd1"][1], params["d1"][1]], axis=0)
    add_linear("heads", w_heads, b_heads, m_hint=2 * B)
    meta["gd1_n"] = params["gd1"][0].shape[1]
    meta["d1_n"] = params["d1"][0].shape[1]

    add_linear("gd2", *params["gd2"], m_hint=2 * B)
    add_linear("d2", *params["d2"], m_hint=2 * B)
    add_linear("d3", *params["d3"], m_hint=2 * B)
    return meta, consts


# ----------------------------------------------------------------------------
# Forward pass (DGalexnet.forward).
# ----------------------------------------------------------------------------
def dgalexnet_forward(meta, consts, x_nchw, training=True):
    x = jnp.transpose(x_nchw, (0, 2, 3, 1)).astype(jnp.bfloat16)  # NCHW -> NHWC
    x = conv2d(meta["conv1"], consts["conv1"], x, relu=True)
    x = maxpool(x)
    x = conv2d(meta["conv2"], consts["conv2"], x, relu=True)
    x = maxpool(x)
    x = conv2d(meta["conv3"], consts["conv3"], x, relu=True)
    x = conv2d(meta["conv4"], consts["conv4"], x, relu=True)
    x = conv2d(meta["conv5"], consts["conv5"], x, relu=True)
    x = maxpool(x)                                        # (B, 6, 6, 256) bf16

    B = x.shape[0]
    # flatten in PyTorch (C, H, W) order to match x.view(B, 256*6*6)
    x = jnp.transpose(x, (0, 3, 1, 2)).reshape(B, 256 * 6 * 6)

    # feature_layers: Dropout -> Linear -> ReLU -> Dropout -> Linear -> ReLU
    # TODO(synk): Dropout treated as identity (eval-mode numerics).
    x = apply_linear(meta["fc1"], consts["fc1"], x, relu=True)
    x = apply_linear(meta["fc2"], consts["fc2"], x, relu=True)

    if not training:
        return apply_linear(meta["fc"], consts["fc"], x, relu=False)

    # Generator (assumed 4096 -> 4096 MLP)
    g = apply_linear(meta["gen1"], consts["gen1"], x, relu=True)
    G_x = apply_linear(meta["gen2"], consts["gen2"], g, relu=False)

    concat_x = jnp.concatenate([x, G_x], axis=0)          # (2B, 4096)

    # Fused heads: [fc | gd1 | d1] on concat_x; ReLU applied per-slice after.
    head = apply_linear(meta["heads"], consts["heads"], concat_x, relu=False)
    nc = meta["num_classes"]
    n_gd, n_d = meta["gd1_n"], meta["d1_n"]
    concat_class = head[:, :nc]
    h_gd = jnp.maximum(head[:, nc:nc + n_gd], 0.0)
    h_d = jnp.maximum(head[:, nc + n_gd:nc + n_gd + n_d], 0.0)

    # GDiscriminator tail (GRL is identity in forward)
    concat_dis = apply_linear(meta["gd2"], consts["gd2"], h_gd, relu=False)

    # Discriminator tail (GRL is identity in forward)
    d = apply_linear(meta["d2"], consts["d2"], h_d, relu=True)
    concat_domain = apply_linear(meta["d3"], consts["d3"], d, relu=False)

    output_class = concat_class[:B, :]
    G_class = concat_class[B:, :]
    output_domain = concat_domain[:B, :]
    G_domain = concat_domain[:B, :]   # matches reference code (same slice)

    return (output_class, output_domain, x, G_x, G_class, G_domain, concat_dis)


# ----------------------------------------------------------------------------
# Small numerical self-test of the Pallas linear (both kernel variants).
# ----------------------------------------------------------------------------
def _self_test_linear():
    key = jax.random.PRNGKey(123)
    k1, k2, k3 = jax.random.split(key, 3)
    M, K, N = 24, 1000, 300
    x = jax.random.normal(k1, (M, K), jnp.float32)
    w = jax.random.normal(k2, (K, N), jnp.float32) * 0.05
    b = jax.random.normal(k3, (N,), jnp.float32)
    ref = jnp.maximum(
        x.astype(jnp.bfloat16).astype(jnp.float32)
        @ w.astype(jnp.bfloat16).astype(jnp.float32) + b, 0.0)
    scale = float(jnp.max(jnp.abs(ref))) + 1.0
    for budget in (None, 512 * 1024):      # single-k kernel, then multi-k kernel
        m, c = prep_linear(w, b, m_hint=M, budget=budget)
        out = apply_linear(m, c, x, relu=True)
        err = float(jnp.max(jnp.abs(out - ref)))
        assert err <= 2e-2 * scale, ("linear self-test failed", budget, err, scale)


if __name__ == "__main__":
    key = jax.random.PRNGKey(0)
    pkey, xkey = jax.random.split(key)

    num_classes, num_domains = 7, 3
    params = init_params(pkey, num_classes=num_classes, num_domains=num_domains)

    _self_test_linear()

    # AlexNet features require 224x224 spatial input to reach 256*6*6.
    B = 2
    meta, consts = prepare_params(params, batch=B, image_hw=224,
                                  num_classes=num_classes,
                                  num_domains=num_domains)
    consts = jax.block_until_ready(consts)

    x = jax.random.normal(xkey, (B, 3, 224, 224), jnp.float32)

    def fwd_train(c, xin):
        return dgalexnet_forward(meta, c, xin, training=True)

    fwd = jax.jit(fwd_train)
    outs = jax.block_until_ready(fwd(consts, x))

    (output_class, output_domain, feat, G_x, G_class, G_domain, concat_dis) = outs
    assert output_class.shape == (B, num_classes)
    assert output_domain.shape == (B, num_domains)
    assert feat.shape == (B, 4096)
    assert G_x.shape == (B, 4096)
    assert G_class.shape == (B, num_classes)
    assert G_domain.shape == (B, num_domains)
    assert concat_dis.shape == (2 * B, 2)
    for t in outs:
        assert jnp.all(jnp.isfinite(t)), "non-finite output"

    print("KERNEL_OK")
</pallas_src>

<mosaic_0001>
module attributes {stable_mosaic.version = 11 : i64} {
  func.func @_matmul_kernel_single(%arg0: i32, %arg1: i32, %arg2: memref<24x1024xbf16, #tpu.memory_space<vmem>>, %arg3: memref<1x1x1024x128xbf16, #tpu.memory_space<vmem>>, %arg4: memref<1x128xf32, #tpu.memory_space<vmem>>, %arg5: memref<24x128xf32, #tpu.memory_space<vmem>>) attributes {dimension_semantics = [#tpu.dimension_semantics<parallel>, #tpu.dimension_semantics<parallel>], iteration_bounds = array<i64: 1, 3>, scalar_prefetch = 0 : i64, scratch_operands = 0 : i64, tpu.core_type = #tpu.core_type<tc>, window_params = [{transform_indices = @transform_0, window_bounds = array<i64: 24, 1024>}, {transform_indices = @transform_1, window_bounds = array<i64: 1, 1, 1024, 128>}, {transform_indices = @transform_2, window_bounds = array<i64: 1, 128>}, {transform_indices = @transform_3, window_bounds = array<i64: 24, 128>}]} {
    %c0 = arith.constant 0 : index
    %c0_0 = arith.constant 0 : index
    %0 = vector.load %arg2[%c0, %c0_0] : memref<24x1024xbf16, #tpu.memory_space<vmem>>, vector<24x1024xbf16>
    %c0_1 = arith.constant 0 : index
    %c0_2 = arith.constant 0 : index
    %c0_3 = arith.constant 0 : index
    %c0_4 = arith.constant 0 : index
    %1 = vector.load %arg3[%c0_1, %c0_2, %c0_3, %c0_4] : memref<1x1x1024x128xbf16, #tpu.memory_space<vmem>>, vector<1x1x1024x128xbf16>
    %2 = vector.shape_cast %1 : vector<1x1x1024x128xbf16> to vector<1024x128xbf16>
    %cst = arith.constant dense<0.000000e+00> : vector<24x128xf32>
    %3 = tpu.matmul %0, %2, %cst {dimension_numbers = #tpu.dot_dimension_numbers<[1], [0], [0], [1], [0, 0, 1, 1], [], []>} : vector<24x1024xbf16>, vector<1024x128xbf16>, vector<24x128xf32> -> vector<24x128xf32>
    %c0_5 = arith.constant 0 : index
    %c0_6 = arith.constant 0 : index
    %4 = vector.load %arg4[%c0_5, %c0_6] : memref<1x128xf32, #tpu.memory_space<vmem>>, vector<1x128xf32>
    %5 = vector.broadcast %4 : vector<1x128xf32> to vector<24x128xf32>
    %6 = arith.addf %3, %5 : vector<24x128xf32>
    %cst_7 = arith.constant 0.000000e+00 : f32
    %7 = vector.broadcast %cst_7 : f32 to vector<24x128xf32>
    %8 = arith.maximumf %6, %7 : vector<24x128xf32>
    %c0_8 = arith.constant 0 : index
    %c0_9 = arith.constant 0 : index
    %9 = vector.load %arg5[%c0_8, %c0_9] : memref<24x128xf32, #tpu.memory_space<vmem>>, vector<24x128xf32>
    tpu.vector_store %arg5[%c0_8, %c0_9], %8 {strides = array<i32>} : memref<24x128xf32, #tpu.memory_space<vmem>>, vector<24x128xf32>,
    return
  }
  func.func @transform_0(%arg0: i32, %arg1: i32) -> (i32, i32) {
    %c0_i32 = arith.constant 0 : i32
    %c0_i32_0 = arith.constant 0 : i32
    return %arg0, %c0_i32 : i32, i32
  }
  func.func @transform_1(%arg0: i32, %arg1: i32) -> (i32, i32, i32, i32) {
    %c0_i32 = arith.constant 0 : i32
    %c0_i32_0 = arith.constant 0 : i32
    %c0_i32_1 = arith.constant 0 : i32
    %c0_i32_2 = arith.constant 0 : i32
    return %arg1, %c0_i32, %c0_i32_0, %c0_i32_1 : i32, i32, i32, i32
  }
  func.func @transform_2(%arg0: i32, %arg1: i32) -> (i32, i32) {
    %c0_i32 = arith.constant 0 : i32
    %c0_i32_0 = arith.constant 0 : i32
    return %c0_i32, %arg1 : i32, i32
  }
  func.func @transform_3(%arg0: i32, %arg1: i32) -> (i32, i32) {
    %c0_i32 = arith.constant 0 : i32
    return %arg0, %arg1 : i32, i32
  }
}

</mosaic_0001>

<llo_original>
// kernel: tpu_custom_call.1
$region0: #{tpu_custom_call.1}
  #allocation0 [shape = 'u32[]', space=smem, size = 0x4, offset = 0x4, fixed_abs, tag = 'smem constant byte address 0x4 - core index']
  #allocation1 [shape = 'u32[144,128]{1,0:T(1,128)}', space=vmem, size = 0x12000, scoped, tag = 'internal scratch']
  %s0 = inlined_call_operand.hbm [shape: bf16[24,1024], index: 0, kind: input, shape index: {}]
  %s1 = inlined_call_operand.hbm [shape: bf16[3,1,1024,128], index: 1, kind: input, shape index: {}]
  %s2 = inlined_call_operand.vmem [shape: f32[1,384], index: 2, kind: input, shape index: {}]
  %s3 = inlined_call_operand.hbm [shape: f32[24,384], index: 3, kind: output, shape index: {}]
  %s4 = sld [smem:[#allocation0]]
  $region53: #{tpu_custom_call.1} parent=0
    _
  %s6 = ssub.s32 1, %s4
  %s7 = scalar_select 0, %s6, %s4
  $region1: #{tpu_custom_call.1} parent=0
    #allocation2 [shape = 'u8[49152]{0}', space=vmem, size = 0xc000, scoped, tag = 'input window, operand 0, single buffered']
    #allocation3 [shape = 's32[2]{0}', space=sflag, size = 0x8, scoped, tag = 'scoped memory for tpu_custom_call.1']
    #allocation4 [shape = 's32[2]{0}', space=sflag, size = 0x8, scoped, tag = 'scoped memory for tpu_custom_call.1']
    #allocation5 [shape = 'u8[524288]{0}', space=vmem, size = 0x80000, scoped, tag = 'input window, operand 1']
    #allocation6 [shape = 's32[2]{0}', space=sflag, size = 0x8, scoped, tag = 'scoped memory for tpu_custom_call.1']
    #allocation7 [shape = 'u8[24576]{0}', space=vmem, size = 0x6000, scoped, tag = 'output window, operand 0']
    %8 = vsyncpa [#allocation3], 0
    %9 = vsyncpa [#allocation6], 0
    %s10 = scalar_lea.sflag [#allocation6], 1
    %11 = vsyncpa %s10, 0
    %12 = vsyncpa [#allocation4], 0
    %s13 = scalar_lea.sflag [#allocation4], 1
    %14 = vsyncpa %s13, 0
    loop: start=0, step=1, limit=5
    $region2: #{tpu_custom_call.1} parent=1 // loop_pre_header
      _
    $region3: #{tpu_custom_call.1} parent=1 // loop_header
      %s16 = sphi 0, %s20
      %p17 = scmp.ge.s32.totalorder %s16, 5
      %s23 = sphi 0, %s35
      %s24 = sphi 0, %s31
      %s25 = sphi 0, %s23
      %s26 = sphi 0, %s24
      %s27 = sphi 0, %s25
      %s28 = sphi 0, %s26
      %s38 = sphi 0, %s40
      %s41 = sphi 0, %s38
      %s42 = sphi 0, %s41
      %s58 = sphi 0, %s42
      %s64 = sphi 0, %s66
      %s67 = sphi 0, %s64
      %s68 = sphi 0, %s67
      %s84 = sphi 0, %s68
      %s90 = sphi 0, %s92
      %s93 = sphi 0, %s90
      %s94 = sphi 0, %s93
      %s110 = sphi 0, %s94
      %s118 = sphi 0, %s120
      %s121 = sphi 0, %s118
      %s122 = sphi 0, %s121
      %s138 = sphi 0, %s122
    $region4: #{tpu_custom_call.1} parent=1 // loop_header_branch
      %19 = sbr.rel (%p17) target = $region8
    $region5: #{tpu_custom_call.1} parent=1 // loop_body
      %s21 = ssub.s32 %s16, 1
      %s22 = ssub.s32 %s16, 2
      %s29 = sadd.s32 1, %s24
      %p30 = scmp.ge.s32.totalorder %s29, 3
      %s31 = scalar_select %p30, 0, %s29
      %s32 = sadd.s32 1, %s23
      %s33 = scalar_select %p30, %s32, %s23
      %p34 = scmp.ge.s32.totalorder %s33, 1
      %s35 = scalar_select %p34, 0, %s33
      %s36 = ssub.s32 %s23, %s35
      %p37 = scmp.eq.s32.totalorder %s36, 0
      %s39 = sadd.s32 %s38, 1
      %s40 = scalar_select %p37, %s38, %s39
      %p43 = pneg %p37
      %p44 = scmp.eq.s32.totalorder %s16, 2
      %p45 = por %p43, %p44
      %p46 = scmp.ne.s32.totalorder %s38, %s41
      %p47 = scmp.eq.s32.totalorder %s16, 0
      %p48 = por %p46, %p47
      %p49 = scmp.ne.s32.totalorder %s38, %s41
      %p50 = scmp.eq.s32.totalorder %s21, 2
      %p51 = por %p49, %p50
      %p52 = scmp.ne.s32.totalorder %s41, %s42
      %p53 = scmp.eq.s32.totalorder %s21, 0
      %p54 = por %p52, %p53
      %p55 = scmp.ne.s32.totalorder %s41, %s42
      %p56 = scmp.eq.s32.totalorder %s22, 2
      %p57 = por %p55, %p56
      %p59 = scmp.ne.s32.totalorder %s42, %s58
      %p60 = scmp.eq.s32.totalorder %s22, 0
      %p61 = por %p59, %p60
      %s62 = ssub.s32 %s24, %s31
      %p63 = scmp.eq.s32.totalorder %s62, 0
      %s65 = sadd.s32 %s64, 1
      %s66 = scalar_select %p63, %s64, %s65
      %p69 = pneg %p63
      %p70 = scmp.eq.s32.totalorder %s16, 2
      %p71 = por %p69, %p70
      %p72 = scmp.ne.s32.totalorder %s64, %s67
      %p73 = scmp.eq.s32.totalorder %s16, 0
      %p74 = por %p72, %p73
      %p75 = scmp.ne.s32.totalorder %s64, %s67
      %p76 = scmp.eq.s32.totalorder %s21, 2
      %p77 = por %p75, %p76
      %p78 = scmp.ne.s32.totalorder %s67, %s68
      %p79 = scmp.eq.s32.totalorder %s21, 0
      %p80 = por %p78, %p79
      %p81 = scmp.ne.s32.totalorder %s67, %s68
      %p82 = scmp.eq.s32.totalorder %s22, 2
      %p83 = por %p81, %p82
      %p85 = scmp.ne.s32.totalorder %s68, %s84
      %p86 = scmp.eq.s32.totalorder %s22, 0
      %p87 = por %p85, %p86
      %s88 = ssub.s32 %s24, %s31
      %p89 = scmp.eq.s32.totalorder %s88, 0
      %s91 = sadd.s32 %s90, 1
      %s92 = scalar_select %p89, %s90, %s91
      %p95 = pneg %p89
      %p96 = scmp.eq.s32.totalorder %s16, 2
      %p97 = por %p95, %p96
      %p98 = scmp.ne.s32.totalorder %s90, %s93
      %p99 = scmp.eq.s32.totalorder %s16, 0
      %p100 = por %p98, %p99
      %p101 = scmp.ne.s32.totalorder %s90, %s93
      %p102 = scmp.eq.s32.totalorder %s21, 2
      %p103 = por %p101, %p102
      %p104 = scmp.ne.s32.totalorder %s93, %s94
      %p105 = scmp.eq.s32.totalorder %s21, 0
      %p106 = por %p104, %p105
      %p107 = scmp.ne.s32.totalorder %s93, %s94
      %p108 = scmp.eq.s32.totalorder %s22, 2
      %p109 = por %p107, %p108
      %p111 = scmp.ne.s32.totalorder %s94, %s110
      %p112 = scmp.eq.s32.totalorder %s22, 0
      %p113 = por %p111, %p112
      %s114 = ssub.s32 %s23, %s35
      %s115 = ssub.s32 %s24, %s31
      %s116 = sor.u32 %s114, %s115
      %p117 = scmp.eq.s32.totalorder %s116, 0
      %s119 = sadd.s32 %s118, 1
      %s120 = scalar_select %p117, %s118, %s119
      %p123 = pneg %p117
      %p124 = scmp.eq.s32.totalorder %s16, 2
      %p125 = por %p123, %p124
      %p126 = scmp.ne.s32.totalorder %s118, %s121
      %p127 = scmp.eq.s32.totalorder %s16, 0
      %p128 = por %p126, %p127
      %p129 = scmp.ne.s32.totalorder %s118, %s121
      %p130 = scmp.eq.s32.totalorder %s21, 2
      %p131 = por %p129, %p130
      %p132 = scmp.ne.s32.totalorder %s121, %s122
      %p133 = scmp.eq.s32.totalorder %s21, 0
      %p134 = por %p132, %p133
      %p135 = scmp.ne.s32.totalorder %s121, %s122
      %p136 = scmp.eq.s32.totalorder %s22, 2
      %p137 = por %p135, %p136
      %p139 = scmp.ne.s32.totalorder %s122, %s138
      %p140 = scmp.eq.s32.totalorder %s22, 0
      %p141 = por %p139, %p140
      %p142 = scmp.le.s32.totalorder 1, %s16
      %p143 = scmp.lt.s32.totalorder %s16, 4
      %p144 = pnand %p142, %p143
      %p145 = pneg %p144
      // Predicated region
      $region9: #{tpu_custom_call.1} parent=5 // pred_check
        _
      $region10: #{tpu_custom_call.1} parent=5 // pred_check_branch
        %147 = sbr.rel (%p144) target = $region12
      $region11: #{tpu_custom_call.1} parent=5 // pred_region
        %s148 = ssub.s32 %s16, 1
        // Predicated region
        $region13: #{tpu_custom_call.1} parent=11 // pred_check
          %p149 = pneg %p54
        $region14: #{tpu_custom_call.1} parent=11 // pred_check_branch
          %151 = sbr.rel (%p149) target = $region16
        $region15: #{tpu_custom_call.1} parent=11 // pred_region
          %s152 = smul.u32 3, %s25
          %s154 = ssub.s32 1536, 1536
          %155 = vsyncadd [#allocation3], %s154
          %s156 = smul.addr %s152, 8
          %s157 = smul.addr %s156, 64
          %s158 = scalar_lea.hbm %s0, %s157
          %s159 = sshll.u32 [#allocation2], 4
          %s160 = int_to_ptr.vmem [resolvable:$true] %s159
          %165 = dma.hbm_to_vmem [thread:$0]  %s158, 1536, %s160, [#allocation3], 512, 512, 32
        $region16: #{tpu_custom_call.1} parent=11 // pred_fallthru
          _
      $region12: #{tpu_custom_call.1} parent=5 // pred_fallthru
        _
      %p166 = scmp.lt.s32.totalorder %s16, 3
      // Predicated region
      $region17: #{tpu_custom_call.1} parent=5 // pred_check
        %p167 = pneg %p166
      $region18: #{tpu_custom_call.1} parent=5 // pred_check_branch
        %169 = sbr.rel (%p167) target = $region20
      $region19: #{tpu_custom_call.1} parent=5 // pred_region
        // Predicated region
        $region21: #{tpu_custom_call.1} parent=19 // pred_check
          %p170 = pneg %p74
        $region22: #{tpu_custom_call.1} parent=19 // pred_check_branch
          %172 = sbr.rel (%p170) target = $region24
        $region23: #{tpu_custom_call.1} parent=19 // pred_region
          %s173 = sand.u32 %s64, 1
          %s174 = scalar_lea.sflag [#allocation6], %s173
          %s175 = sand.u32 %s64, 1
          %s176 = smul.addr %s175, 512
          %s177 = scalar_lea.vmem [#allocation5], %s176
          %s179 = ssub.s32 8192, 8192
          %180 = vsyncadd %s174, %s179
          %s181 = smul.addr %s24, 128
          %s182 = smul.addr %s181, 64
          %s183 = scalar_lea.hbm %s1, %s182
          %s184 = sshll.u32 %s177, 4
          %s185 = int_to_ptr.vmem [resolvable:$true] %s184
          %190 = dma.hbm_to_vmem [thread:$0]  %s183, 8192, %s185, %s174, 64, 64, 4
        $region24: #{tpu_custom_call.1} parent=19 // pred_fallthru
          _
        // Predicated region
        $region25: #{tpu_custom_call.1} parent=19 // pred_check
          %p191 = pneg %p100
        $region26: #{tpu_custom_call.1} parent=19 // pred_check_branch
          %193 = sbr.rel (%p191) target = $region28
        $region27: #{tpu_custom_call.1} parent=19 // pred_region
          %p194 = scmp.lt.s32.totalorder %s24, 2
          %s195 = scalar_select %p194, %s24, 2
          %s196 = scalar_lea.vmem %s2, %s195
        $region28: #{tpu_custom_call.1} parent=19 // pred_fallthru
          _
      $region20: #{tpu_custom_call.1} parent=5 // pred_fallthru
        _
      %p197 = scmp.le.s32.totalorder 1, %s16
      %p198 = scmp.lt.s32.totalorder %s16, 4
      %p199 = pnand %p197, %p198
      %p200 = pneg %p199
      // Predicated region
      $region29: #{tpu_custom_call.1} parent=5 // pred_check
        _
      $region30: #{tpu_custom_call.1} parent=5 // pred_check_branch
        %202 = sbr.rel (%p199) target = $region32
      $region31: #{tpu_custom_call.1} parent=5 // pred_region
        %s203 = ssub.s32 %s16, 1
        // Predicated region
        $region33: #{tpu_custom_call.1} parent=31 // pred_check
          %p204 = pneg %p54
        $region34: #{tpu_custom_call.1} parent=31 // pred_check_branch
          %206 = sbr.rel (%p204) target = $region36
        $region35: #{tpu_custom_call.1} parent=31 // pred_region
          %207 = dma.done [#allocation3], 1536
        $region36: #{tpu_custom_call.1} parent=31 // pred_fallthru
          _
        %s208 = sand.u32 %s67, 1
        %s209 = scalar_lea.sflag [#allocation6], %s208
        %s210 = sand.u32 %s67, 1
        %s211 = smul.addr %s210, 512
        %s212 = scalar_lea.vmem [#allocation5], %s211
        // Predicated region
        $region37: #{tpu_custom_call.1} parent=31 // pred_check
          %p213 = pneg %p80
        $region38: #{tpu_custom_call.1} parent=31 // pred_check_branch
          %215 = sbr.rel (%p213) target = $region40
        $region39: #{tpu_custom_call.1} parent=31 // pred_region
          %216 = dma.done %s209, 8192
        $region40: #{tpu_custom_call.1} parent=31 // pred_fallthru
          _
        %p217 = pneg %p54
        %p218 = pneg %p51
        %s219 = sand.u32 %s67, 1
        %s220 = scalar_lea.sflag [#allocation6], %s219
        %s221 = sand.u32 %s67, 1
        %s222 = smul.addr %s221, 512
        %s223 = scalar_lea.vmem [#allocation5], %s222
        %p224 = pneg %p80
        %p225 = pneg %p77
        %p226 = scmp.lt.s32.totalorder %s26, 2
        %s227 = scalar_select %p226, %s26, 2
        %s228 = scalar_lea.vmem %s2, %s227
        %p229 = pneg %p106
        %p230 = pneg %p103
        %p231 = pneg %p134
        %p232 = pneg %p131
        %s233 = sand.u32 %s121, 1
        %s234 = scalar_lea.sflag [#allocation4], %s233
        %s235 = sand.u32 %s121, 1
        %s236 = smul.addr %s235, 24
        %s237 = scalar_lea.vmem [#allocation7], %s236
        %s238 = smul.u32 3, %s25
        %p239 = scmp.lt.s32.totalorder %s26, 2
        %s240 = scalar_select %p239, %s26, 2
        %s241 = scalar_lea.vmem %s2, %s240
        %s242 = smul.u32 3, %s25
        %v244 = vld [vmem:[#allocation2] sm:$0xff]
        %v245 = vld [vmem:[#allocation2 + $0x8] sm:$0xff]
        %v246 = vld [vmem:[#allocation2 + $0x10] sm:$0xff]
        %v247 = vld [vmem:[#allocation2 + $0x18] sm:$0xff]
        %v248 = vld [vmem:[#allocation2 + $0x20] sm:$0xff]
        %v249 = vld [vmem:[#allocation2 + $0x28] sm:$0xff]
        %v250 = vld [vmem:[#allocation2 + $0x30] sm:$0xff]
        %v251 = vld [vmem:[#allocation2 + $0x38] sm:$0xff]
        %v252 = vld [vmem:[#allocation2 + $0x40] sm:$0xff]
        %v253 = vld [vmem:[#allocation2 + $0x48] sm:$0xff]
        %v254 = vld [vmem:[#allocation2 + $0x50] sm:$0xff]
        %v255 = vld [vmem:[#allocation2 + $0x58] sm:$0xff]
        %v256 = vld [vmem:[%s212] sm:$0xf]
        %v257 = vld [vmem:[%s212 + $0x4] sm:$0xf]
        %v258 = vld [vmem:[%s212 + $0x8] sm:$0xf]
        %v259 = vld [vmem:[%s212 + $0xc] sm:$0xf]
        %v260 = vld [vmem:[%s212 + $0x10] sm:$0xf]
        %v261 = vld [vmem:[%s212 + $0x14] sm:$0xf]
        %v262 = vld [vmem:[%s212 + $0x18] sm:$0xf]
        %v263 = vld [vmem:[%s212 + $0x1c] sm:$0xf]
        %v264 = vld [vmem:[%s212 + $0x20] sm:$0xf]
        %v265 = vld [vmem:[%s212 + $0x24] sm:$0xf]
        %v266 = vld [vmem:[%s212 + $0x28] sm:$0xf]
        %v267 = vld [vmem:[%s212 + $0x2c] sm:$0xf]
        %v268 = vld [vmem:[%s212 + $0x30] sm:$0xf]
        %v269 = vld [vmem:[%s212 + $0x34] sm:$0xf]
        %v270 = vld [vmem:[%s212 + $0x38] sm:$0xf]
        %v271 = vld [vmem:[%s212 + $0x3c] sm:$0xf]
        %v272 = vld [vmem:[%s212 + $0x40] sm:$0xf]
        %v273 = vld [vmem:[%s212 + $0x44] sm:$0xf]
        %v274 = vld [vmem:[%s212 + $0x48] sm:$0xf]
        %v275 = vld [vmem:[%s212 + $0x4c] sm:$0xf]
        %v276 = vld [vmem:[%s212 + $0x50] sm:$0xf]
        %v277 = vld [vmem:[%s212 + $0x54] sm:$0xf]
        %v278 = vld [vmem:[%s212 + $0x58] sm:$0xf]
        %v279 = vld [vmem:[%s212 + $0x5c] sm:$0xf]
        %v280 = vld [vmem:[%s212 + $0x60] sm:$0xf]
        %v281 = vld [vmem:[%s212 + $0x64] sm:$0xf]
        %v282 = vld [vmem:[%s212 + $0x68] sm:$0xf]
        %v283 = vld [vmem:[%s212 + $0x6c] sm:$0xf]
        %v284 = vld [vmem:[%s212 + $0x70] sm:$0xf]
        %v285 = vld [vmem:[%s212 + $0x74] sm:$0xf]
        %v286 = vld [vmem:[%s212 + $0x78] sm:$0xf]
        %v287 = vld [vmem:[%s212 + $0x7c] sm:$0xf]
        %v288 = vld [vmem:[%s212 + $0x80] sm:$0xf]
        %v289 = vld [vmem:[%s212 + $0x84] sm:$0xf]
        %v290 = vld [vmem:[%s212 + $0x88] sm:$0xf]
        %v291 = vld [vmem:[%s212 + $0x8c] sm:$0xf]
        %v292 = vld [vmem:[%s212 + $0x90] sm:$0xf]
        %v293 = vld [vmem:[%s212 + $0x94] sm:$0xf]
        %v294 = vld [vmem:[%s212 + $0x98] sm:$0xf]
        %v295 = vld [vmem:[%s212 + $0x9c] sm:$0xf]
        %v296 = vld [vmem:[%s212 + $0xa0] sm:$0xf]
        %v297 = vld [vmem:[%s212 + $0xa4] sm:$0xf]
        %v298 = vld [vmem:[%s212 + $0xa8] sm:$0xf]
        %v299 = vld [vmem:[%s212 + $0xac] sm:$0xf]
        %v300 = vld [vmem:[%s212 + $0xb0] sm:$0xf]
        %v301 = vld [vmem:[%s212 + $0xb4] sm:$0xf]
        %v302 = vld [vmem:[%s212 + $0xb8] sm:$0xf]
        %v303 = vld [vmem:[%s212 + $0xbc] sm:$0xf]
        %v304 = vld [vmem:[%s212 + $0xc0] sm:$0xf]
        %v305 = vld [vmem:[%s212 + $0xc4] sm:$0xf]
        %v306 = vld [vmem:[%s212 + $0xc8] sm:$0xf]
        %v307 = vld [vmem:[%s212 + $0xcc] sm:$0xf]
        %v308 = vld [vmem:[%s212 + $0xd0] sm:$0xf]
        %v309 = vld [vmem:[%s212 + $0xd4] sm:$0xf]
        %v310 = vld [vmem:[%s212 + $0xd8] sm:$0xf]
        %v311 = vld [vmem:[%s212 + $0xdc] sm:$0xf]
        %v312 = vld [vmem:[%s212 + $0xe0] sm:$0xf]
        %v313 = vld [vmem:[%s212 + $0xe4] sm:$0xf]
        %v314 = vld [vmem:[%s212 + $0xe8] sm:$0xf]
        %v315 = vld [vmem:[%s212 + $0xec] sm:$0xf]
        %v316 = vld [vmem:[%s212 + $0xf0] sm:$0xf]
        %v317 = vld [vmem:[%s212 + $0xf4] sm:$0xf]
        %v318 = vld [vmem:[%s212 + $0xf8] sm:$0xf]
        %v319 = vld [vmem:[%s212 + $0xfc] sm:$0xf]
        %v320 = vld [vmem:[%s212 + $0x100] sm:$0xf]
        %v321 = vld [vmem:[%s212 + $0x104] sm:$0xf]
        %v322 = vld [vmem:[%s212 + $0x108] sm:$0xf]
        %v323 = vld [vmem:[%s212 + $0x10c] sm:$0xf]
        %v324 = vld [vmem:[%s212 + $0x110] sm:$0xf]
        %v325 = vld [vmem:[%s212 + $0x114] sm:$0xf]
        %v326 = vld [vmem:[%s212 + $0x118] sm:$0xf]
        %v327 = vld [vmem:[%s212 + $0x11c] sm:$0xf]
        %v328 = vld [vmem:[%s212 + $0x120] sm:$0xf]
        %v329 = vld [vmem:[%s212 + $0x124] sm:$0xf]
        %v330 = vld [vmem:[%s212 + $0x128] sm:$0xf]
        %v331 = vld [vmem:[%s212 + $0x12c] sm:$0xf]
        %v332 = vld [vmem:[%s212 + $0x130] sm:$0xf]
        %v333 = vld [vmem:[%s212 + $0x134] sm:$0xf]
        %v334 = vld [vmem:[%s212 + $0x138] sm:$0xf]
        %v335 = vld [vmem:[%s212 + $0x13c] sm:$0xf]
        %v336 = vld [vmem:[%s212 + $0x140] sm:$0xf]
        %v337 = vld [vmem:[%s212 + $0x144] sm:$0xf]
        %v338 = vld [vmem:[%s212 + $0x148] sm:$0xf]
        %v339 = vld [vmem:[%s212 + $0x14c] sm:$0xf]
        %v340 = vld [vmem:[%s212 + $0x150] sm:$0xf]
        %v341 = vld [vmem:[%s212 + $0x154] sm:$0xf]
        %v342 = vld [vmem:[%s212 + $0x158] sm:$0xf]
        %v343 = vld [vmem:[%s212 + $0x15c] sm:$0xf]
        %v344 = vld [vmem:[%s212 + $0x160] sm:$0xf]
        %v345 = vld [vmem:[%s212 + $0x164] sm:$0xf]
        %v346 = vld [vmem:[%s212 + $0x168] sm:$0xf]
        %v347 = vld [vmem:[%s212 + $0x16c] sm:$0xf]
        %v348 = vld [vmem:[%s212 + $0x170] sm:$0xf]
        %v349 = vld [vmem:[%s212 + $0x174] sm:$0xf]
        %v350 = vld [vmem:[%s212 + $0x178] sm:$0xf]
        %v351 = vld [vmem:[%s212 + $0x17c] sm:$0xf]
        %v352 = vld [vmem:[%s212 + $0x180] sm:$0xf]
        %v353 = vld [vmem:[%s212 + $0x184] sm:$0xf]
        %v354 = vld [vmem:[%s212 + $0x188] sm:$0xf]
        %v355 = vld [vmem:[%s212 + $0x18c] sm:$0xf]
        %v356 = vld [vmem:[%s212 + $0x190] sm:$0xf]
        %v357 = vld [vmem:[%s212 + $0x194] sm:$0xf]
        %v358 = vld [vmem:[%s212 + $0x198] sm:$0xf]
        %v359 = vld [vmem:[%s212 + $0x19c] sm:$0xf]
        %v360 = vld [vmem:[%s212 + $0x1a0] sm:$0xf]
        %v361 = vld [vmem:[%s212 + $0x1a4] sm:$0xf]
        %v362 = vld [vmem:[%s212 + $0x1a8] sm:$0xf]
        %v363 = vld [vmem:[%s212 + $0x1ac] sm:$0xf]
        %v364 = vld [vmem:[%s212 + $0x1b0] sm:$0xf]
        %v365 = vld [vmem:[%s212 + $0x1b4] sm:$0xf]
        %v366 = vld [vmem:[%s212 + $0x1b8] sm:$0xf]
        %v367 = vld [vmem:[%s212 + $0x1bc] sm:$0xf]
        %v368 = vld [vmem:[%s212 + $0x1c0] sm:$0xf]
        %v369 = vld [vmem:[%s212 + $0x1c4] sm:$0xf]
        %v370 = vld [vmem:[%s212 + $0x1c8] sm:$0xf]
        %v371 = vld [vmem:[%s212 + $0x1cc] sm:$0xf]
        %v372 = vld [vmem:[%s212 + $0x1d0] sm:$0xf]
        %v373 = vld [vmem:[%s212 + $0x1d4] sm:$0xf]
        %v374 = vld [vmem:[%s212 + $0x1d8] sm:$0xf]
        %v375 = vld [vmem:[%s212 + $0x1dc] sm:$0xf]
        %v376 = vld [vmem:[%s212 + $0x1e0] sm:$0xf]
        %v377 = vld [vmem:[%s212 + $0x1e4] sm:$0xf]
        %v378 = vld [vmem:[%s212 + $0x1e8] sm:$0xf]
        %v379 = vld [vmem:[%s212 + $0x1ec] sm:$0xf]
        %v380 = vld [vmem:[%s212 + $0x1f0] sm:$0xf]
        %v381 = vld [vmem:[%s212 + $0x1f4] sm:$0xf]
        %v382 = vld [vmem:[%s212 + $0x1f8] sm:$0xf]
        %v383 = vld [vmem:[%s212 + $0x1fc] sm:$0xf]
        %v384 = vld [vmem:[%s241] sm:$0x1]
        %v386 = vlaneseq
        %v387 = vshrl.u32 %v386, 7
        %v388 = vsub.s32 0, %v387
        %v389 = vrot.slane %v384, %v388
        %v403 = vunpack.c.l.b16 %v244
        %v404 = vunpack.c.h.b16 %v244
        %v405 = vunpack.c.l.b16 %v245
        %v406 = vunpack.c.h.b16 %v245
        %v407 = vunpack.c.l.b16 %v246
        %v408 = vunpack.c.h.b16 %v246
        %v409 = vunpack.c.l.b16 %v247
        %v410 = vunpack.c.h.b16 %v247
        %v411 = vunpack.c.l.b16 %v248
        %v412 = vunpack.c.h.b16 %v248
        %v413 = vunpack.c.l.b16 %v249
        %v414 = vunpack.c.h.b16 %v249
        %v415 = vunpack.c.l.b16 %v250
        %v416 = vunpack.c.h.b16 %v250
        %v417 = vunpack.c.l.b16 %v251
        %v418 = vunpack.c.h.b16 %v251
        %v419 = vunpack.c.l.b16 %v252
        %v420 = vunpack.c.h.b16 %v252
        %v421 = vunpack.c.l.b16 %v253
        %v422 = vunpack.c.h.b16 %v253
        %v423 = vunpack.c.l.b16 %v254
        %v424 = vunpack.c.h.b16 %v254
        %v425 = vunpack.c.l.b16 %v255
        %v426 = vunpack.c.h.b16 %v255
        %v427 = vpack.c.b16 %v411, %v403
        %v428 = vpack.c.b16 %v412, %v404
        %v429 = vpack.c.b16 %v413, %v405
        %v430 = vpack.c.b16 %v414, %v406
        %v431 = vpack.c.b16 %v415, %v407
        %v432 = vpack.c.b16 %v416, %v408
        %v433 = vpack.c.b16 %v417, %v409
        %v434 = vpack.c.b16 %v418, %v410
        %v435 = vpack.c.b16 %v419, %v419
        %v436 = vpack.c.b16 %v420, %v420
        %v437 = vpack.c.b16 %v421, %v421
        %v438 = vpack.c.b16 %v422, %v422
        %v439 = vpack.c.b16 %v423, %v423
        %v440 = vpack.c.b16 %v424, %v424
        %v441 = vpack.c.b16 %v425, %v425
        %v442 = vpack.c.b16 %v426, %v426
        %v587 = vunpack.c.l.b16 %v256
        %v588 = vunpack.c.l.b16 %v257
        %v589 = vunpack.c.l.b16 %v258
        %v590 = vunpack.c.l.b16 %v259
        %v591 = vunpack.c.l.b16 %v260
        %v592 = vunpack.c.l.b16 %v261
        %v593 = vunpack.c.l.b16 %v262
        %v594 = vunpack.c.l.b16 %v263
        %v595 = vunpack.c.l.b16 %v264
        %v596 = vunpack.c.l.b16 %v265
        %v597 = vunpack.c.l.b16 %v266
        %v598 = vunpack.c.l.b16 %v267
        %v599 = vunpack.c.l.b16 %v268
        %v600 = vunpack.c.l.b16 %v269
        %v601 = vunpack.c.l.b16 %v270
        %v602 = vunpack.c.l.b16 %v271
        %v603 = vunpack.c.l.b16 %v272
        %v604 = vunpack.c.l.b16 %v273
        %v605 = vunpack.c.l.b16 %v274
        %v606 = vunpack.c.l.b16 %v275
        %v607 = vunpack.c.l.b16 %v276
        %v608 = vunpack.c.l.b16 %v277
        %v609 = vunpack.c.l.b16 %v278
        %v610 = vunpack.c.l.b16 %v279
        %v611 = vunpack.c.l.b16 %v280
        %v612 = vunpack.c.l.b16 %v281
        %v613 = vunpack.c.l.b16 %v282
        %v614 = vunpack.c.l.b16 %v283
        %v615 = vunpack.c.l.b16 %v284
        %v616 = vunpack.c.l.b16 %v285
        %v617 = vunpack.c.l.b16 %v286
        %v618 = vunpack.c.l.b16 %v287
        %v619 = vunpack.c.l.b16 %v288
        %v620 = vunpack.c.l.b16 %v289
        %v621 = vunpack.c.l.b16 %v290
        %v622 = vunpack.c.l.b16 %v291
        %v623 = vunpack.c.l.b16 %v292
        %v624 = vunpack.c.l.b16 %v293
        %v625 = vunpack.c.l.b16 %v294
        %v626 = vunpack.c.l.b16 %v295
        %v627 = vunpack.c.l.b16 %v296
        %v628 = vunpack.c.l.b16 %v297
        %v629 = vunpack.c.l.b16 %v298
        %v630 = vunpack.c.l.b16 %v299
        %v631 = vunpack.c.l.b16 %v300
        %v632 = vunpack.c.l.b16 %v301
        %v633 = vunpack.c.l.b16 %v302
        %v634 = vunpack.c.l.b16 %v303
        %v635 = vunpack.c.l.b16 %v304
        %v636 = vunpack.c.l.b16 %v305
        %v637 = vunpack.c.l.b16 %v306
        %v638 = vunpack.c.l.b16 %v307
        %v639 = vunpack.c.l.b16 %v308
        %v640 = vunpack.c.l.b16 %v309
        %v641 = vunpack.c.l.b16 %v310
        %v642 = vunpack.c.l.b16 %v311
        %v643 = vunpack.c.l.b16 %v312
        %v644 = vunpack.c.l.b16 %v313
        %v645 = vunpack.c.l.b16 %v314
        %v646 = vunpack.c.l.b16 %v315
        %v647 = vunpack.c.l.b16 %v316
        %v648 = vunpack.c.l.b16 %v317
        %v649 = vunpack.c.l.b16 %v318
        %v650 = vunpack.c.l.b16 %v319
        %v651 = vunpack.c.l.b16 %v320
        %v652 = vunpack.c.l.b16 %v321
        %v653 = vunpack.c.l.b16 %v322
        %v654 = vunpack.c.l.b16 %v323
        %v655 = vunpack.c.l.b16 %v324
        %v656 = vunpack.c.l.b16 %v325
        %v657 = vunpack.c.l.b16 %v326
        %v658 = vunpack.c.l.b16 %v327
        %v659 = vunpack.c.l.b16 %v328
        %v660 = vunpack.c.l.b16 %v329
        %v661 = vunpack.c.l.b16 %v330
        %v662 = vunpack.c.l.b16 %v331
        %v663 = vunpack.c.l.b16 %v332
        %v664 = vunpack.c.l.b16 %v333
        %v665 = vunpack.c.l.b16 %v334
        %v666 = vunpack.c.l.b16 %v335
        %v667 = vunpack.c.l.b16 %v336
        %v668 = vunpack.c.l.b16 %v337
        %v669 = vunpack.c.l.b16 %v338
        %v670 = vunpack.c.l.b16 %v339
        %v671 = vunpack.c.l.b16 %v340
        %v672 = vunpack.c.l.b16 %v341
        %v673 = vunpack.c.l.b16 %v342
        %v674 = vunpack.c.l.b16 %v343
        %v675 = vunpack.c.l.b16 %v344
        %v676 = vunpack.c.l.b16 %v345
        %v677 = vunpack.c.l.b16 %v346
        %v678 = vunpack.c.l.b16 %v347
        %v679 = vunpack.c.l.b16 %v348
        %v680 = vunpack.c.l.b16 %v349
        %v681 = vunpack.c.l.b16 %v350
        %v682 = vunpack.c.l.b16 %v351
        %v683 = vunpack.c.l.b16 %v352
        %v684 = vunpack.c.l.b16 %v353
        %v685 = vunpack.c.l.b16 %v354
        %v686 = vunpack.c.l.b16 %v355
        %v687 = vunpack.c.l.b16 %v356
        %v688 = vunpack.c.l.b16 %v357
        %v689 = vunpack.c.l.b16 %v358
        %v690 = vunpack.c.l.b16 %v359
        %v691 = vunpack.c.l.b16 %v360
        %v692 = vunpack.c.l.b16 %v361
        %v693 = vunpack.c.l.b16 %v362
        %v694 = vunpack.c.l.b16 %v363
        %v695 = vunpack.c.l.b16 %v364
        %v696 = vunpack.c.l.b16 %v365
        %v697 = vunpack.c.l.b16 %v366
        %v698 = vunpack.c.l.b16 %v367
        %v699 = vunpack.c.l.b16 %v368
        %v700 = vunpack.c.l.b16 %v369
        %v701 = vunpack.c.l.b16 %v370
        %v702 = vunpack.c.l.b16 %v371
        %v703 = vunpack.c.l.b16 %v372
        %v704 = vunpack.c.l.b16 %v373
        %v705 = vunpack.c.l.b16 %v374
        %v706 = vunpack.c.l.b16 %v375
        %v707 = vunpack.c.l.b16 %v376
        %v708 = vunpack.c.l.b16 %v377
        %v709 = vunpack.c.l.b16 %v378
        %v710 = vunpack.c.l.b16 %v379
        %v711 = vunpack.c.l.b16 %v380
        %v712 = vunpack.c.l.b16 %v381
        %v713 = vunpack.c.l.b16 %v382
        %v714 = vunpack.c.l.b16 %v383
        %v715 = vpack.c.b16 %v588, %v587
        %v716 = vpack.c.b16 %v590, %v589
        %v717 = vpack.c.b16 %v592, %v591
        %v718 = vpack.c.b16 %v594, %v593
        %v719 = vpack.c.b16 %v596, %v595
        %v720 = vpack.c.b16 %v598, %v597
        %v721 = vpack.c.b16 %v600, %v599
        %v722 = vpack.c.b16 %v602, %v601
        %v723 = vpack.c.b16 %v604, %v603
        %v724 = vpack.c.b16 %v606, %v605
        %v725 = vpack.c.b16 %v608, %v607
        %v726 = vpack.c.b16 %v610, %v609
        %v727 = vpack.c.b16 %v612, %v611
        %v728 = vpack.c.b16 %v614, %v613
        %v729 = vpack.c.b16 %v616, %v615
        %v730 = vpack.c.b16 %v618, %v617
        %v731 = vpack.c.b16 %v620, %v619
        %v732 = vpack.c.b16 %v622, %v621
        %v733 = vpack.c.b16 %v624, %v623
        %v734 = vpack.c.b16 %v626, %v625
        %v735 = vpack.c.b16 %v628, %v627
        %v736 = vpack.c.b16 %v630, %v629
        %v737 = vpack.c.b16 %v632, %v631
        %v738 = vpack.c.b16 %v634, %v633
        %v739 = vpack.c.b16 %v636, %v635
        %v740 = vpack.c.b16 %v638, %v637
        %v741 = vpack.c.b16 %v640, %v639
        %v742 = vpack.c.b16 %v642, %v641
        %v743 = vpack.c.b16 %v644, %v643
        %v744 = vpack.c.b16 %v646, %v645
        %v745 = vpack.c.b16 %v648, %v647
        %v746 = vpack.c.b16 %v650, %v649
        %v747 = vpack.c.b16 %v652, %v651
        %v748 = vpack.c.b16 %v654, %v653
        %v749 = vpack.c.b16 %v656, %v655
        %v750 = vpack.c.b16 %v658, %v657
        %v751 = vpack.c.b16 %v660, %v659
        %v752 = vpack.c.b16 %v662, %v661
        %v753 = vpack.c.b16 %v664, %v663
        %v754 = vpack.c.b16 %v666, %v665
        %v755 = vpack.c.b16 %v668, %v667
        %v756 = vpack.c.b16 %v670, %v669
        %v757 = vpack.c.b16 %v672, %v671
        %v758 = vpack.c.b16 %v674, %v673
        %v759 = vpack.c.b16 %v676, %v675
        %v760 = vpack.c.b16 %v678, %v677
        %v761 = vpack.c.b16 %v680, %v679
        %v762 = vpack.c.b16 %v682, %v681
        %v763 = vpack.c.b16 %v684, %v683
        %v764 = vpack.c.b16 %v686, %v685
        %v765 = vpack.c.b16 %v688, %v687
        %v766 = vpack.c.b16 %v690, %v689
        %v767 = vpack.c.b16 %v692, %v691
        %v768 = vpack.c.b16 %v694, %v693
        %v769 = vpack.c.b16 %v696, %v695
        %v770 = vpack.c.b16 %v698, %v697
        %v771 = vpack.c.b16 %v700, %v699
        %v772 = vpack.c.b16 %v702, %v701
        %v773 = vpack.c.b16 %v704, %v703
        %v774 = vpack.c.b16 %v706, %v705
        %v775 = vpack.c.b16 %v708, %v707
        %v776 = vpack.c.b16 %v710, %v709
        %v777 = vpack.c.b16 %v712, %v711
        %v778 = vpack.c.b16 %v714, %v713
        %843 = vmatprep.subr.bf16.mxu0 0
        %844 = vmatpush1.bf16.msra.mxu0 %v722
        %845 = vmatprep.subr.bf16.mxu0 0
        %846 = vmatpush1.bf16.msra.mxu0 %v721
        %847 = vmatprep.subr.bf16.mxu0 0
        %848 = vmatpush1.bf16.msra.mxu0 %v720
        %849 = vmatprep.subr.bf16.mxu0 0
        %850 = vmatpush1.bf16.msra.mxu0 %v719
        %851 = vmatprep.subr.bf16.mxu0 0
        %852 = vmatpush1.bf16.msra.mxu0 %v718
        %853 = vmatprep.subr.bf16.mxu0 0
        %854 = vmatpush1.bf16.msra.mxu0 %v717
        %855 = vmatprep.subr.bf16.mxu0 0
        %856 = vmatpush1.bf16.msra.mxu0 %v716
        %857 = vmatprep.subr.bf16.mxu0 0
        %858 = vmatpush1.bf16.msra.mxu0 %v715
        %859 = vmatprep.subr.bf16.mxu0 0
        %860 = vmatpush2.bf16.msra.mxu0 %v730
        %861 = vmatprep.subr.bf16.mxu0 0
        %862 = vmatpush2.bf16.msra.mxu0 %v729
        %863 = vmatprep.subr.bf16.mxu0 0
        %864 = vmatpush2.bf16.msra.mxu0 %v728
        %865 = vmatprep.subr.bf16.mxu0 0
        %866 = vmatpush2.bf16.msra.mxu0 %v727
        %867 = vmatprep.subr.bf16.mxu0 0
        %868 = vmatpush2.bf16.msra.mxu0 %v726
        %869 = vmatprep.subr.bf16.mxu0 0
        %870 = vmatpush2.bf16.msra.mxu0 %v725
        %871 = vmatprep.subr.bf16.mxu0 0
        %872 = vmatpush2.bf16.msra.mxu0 %v724
        %873 = vmatprep.subr.bf16.mxu0 0
        %874 = vmatpush2.bf16.msra.mxu0 %v723
        %875 = vmatprep.mubr.bf16.mxu0 %v428
        %876 = vmatmul.mubr.bf16.gmra.mxu0 %v427
        %v877 = vpop.f32.mrf.mxu0
        %v878 = vadd.f32 %v389, %v877
        %v879 = vpop.f32.mrf.mxu0
        %v880 = vpop.f32.mrf.mxu0
        %v881 = vadd.f32 %v389, %v880
        %v882 = vpop.f32.mrf.mxu0
        %883 = vmatprep.mubr.bf16.mxu0 %v436
        %884 = vmatmul.mubr.bf16.gmra.mxu0 %v435
        %v885 = vpop.f32.mrf.mxu0
        %v886 = vadd.f32 %v389, %v885
        %v887 = vpop.f32.mrf.mxu0
        %v888 = vpop.f32.mrf.mxu0
        %v889 = vpop.f32.mrf.mxu0
        %890 = vdwg.mxu0
        %891 = vmatprep.subr.bf16.mxu0 0
        %892 = vmatpush1.bf16.msra.mxu0 %v738
        %893 = vmatprep.subr.bf16.mxu0 0
        %894 = vmatpush1.bf16.msra.mxu0 %v737
        %895 = vmatprep.subr.bf16.mxu0 0
        %896 = vmatpush1.bf16.msra.mxu0 %v736
        %897 = vmatprep.subr.bf16.mxu0 0
        %898 = vmatpush1.bf16.msra.mxu0 %v735
        %899 = vmatprep.subr.bf16.mxu0 0
        %900 = vmatpush1.bf16.msra.mxu0 %v734
        %901 = vmatprep.subr.bf16.mxu0 0
        %902 = vmatpush1.bf16.msra.mxu0 %v733
        %903 = vmatprep.subr.bf16.mxu0 0
        %904 = vmatpush1.bf16.msra.mxu0 %v732
        %905 = vmatprep.subr.bf16.mxu0 0
        %906 = vmatpush1.bf16.msra.mxu0 %v731
        %907 = vmatprep.subr.bf16.mxu0 0
        %908 = vmatpush2.bf16.msra.mxu0 %v746
        %909 = vmatprep.subr.bf16.mxu0 0
        %910 = vmatpush2.bf16.msra.mxu0 %v745
        %911 = vmatprep.subr.bf16.mxu0 0
        %912 = vmatpush2.bf16.msra.mxu0 %v744
        %913 = vmatprep.subr.bf16.mxu0 0
        %914 = vmatpush2.bf16.msra.mxu0 %v743
        %915 = vmatprep.subr.bf16.mxu0 0
        %916 = vmatpush2.bf16.msra.mxu0 %v742
        %917 = vmatprep.subr.bf16.mxu0 0
        %918 = vmatpush2.bf16.msra.mxu0 %v741
        %919 = vmatprep.subr.bf16.mxu0 0
        %920 = vmatpush2.bf16.msra.mxu0 %v740
        %921 = vmatprep.subr.bf16.mxu0 0
        %922 = vmatpush2.bf16.msra.mxu0 %v739
        %923 = vmatprep.mubr.bf16.mxu0 %v430
        %924 = vmatmul.mubr.bf16.gmra.mxu0 %v429
        %v925 = vpop.f32.mrf.mxu0
        %v926 = vadd.f32 %v878, %v925
        %v927 = vpop.f32.mrf.mxu0
        %v928 = vpop.f32.mrf.mxu0
        %v929 = vadd.f32 %v881, %v928
        %v930 = vpop.f32.mrf.mxu0
        %931 = vmatprep.mubr.bf16.mxu0 %v438
        %932 = vmatmul.mubr.bf16.gmra.mxu0 %v437
        %v933 = vpop.f32.mrf.mxu0
        %v934 = vadd.f32 %v886, %v933
        %v935 = vpop.f32.mrf.mxu0
        %v936 = vpop.f32.mrf.mxu0
        %v937 = vpop.f32.mrf.mxu0
        %938 = vdwg.mxu0
        %939 = vmatprep.subr.bf16.mxu0 0
        %940 = vmatpush1.bf16.msra.mxu0 %v754
        %941 = vmatprep.subr.bf16.mxu0 0
        %942 = vmatpush1.bf16.msra.mxu0 %v753
        %943 = vmatprep.subr.bf16.mxu0 0
        %944 = vmatpush1.bf16.msra.mxu0 %v752
        %945 = vmatprep.subr.bf16.mxu0 0
        %946 = vmatpush1.bf16.msra.mxu0 %v751
        %947 = vmatprep.subr.bf16.mxu0 0
        %948 = vmatpush1.bf16.msra.mxu0 %v750
        %949 = vmatprep.subr.bf16.mxu0 0
        %950 = vmatpush1.bf16.msra.mxu0 %v749
        %951 = vmatprep.subr.bf16.mxu0 0
        %952 = vmatpush1.bf16.msra.mxu0 %v748
        %953 = vmatprep.subr.bf16.mxu0 0
        %954 = vmatpush1.bf16.msra.mxu0 %v747
        %955 = vmatprep.subr.bf16.mxu0 0
        %956 = vmatpush2.bf16.msra.mxu0 %v762
        %957 = vmatprep.subr.bf16.mxu0 0
        %958 = vmatpush2.bf16.msra.mxu0 %v761
        %959 = vmatprep.subr.bf16.mxu0 0
        %960 = vmatpush2.bf16.msra.mxu0 %v760
        %961 = vmatprep.subr.bf16.mxu0 0
        %962 = vmatpush2.bf16.msra.mxu0 %v759
        %963 = vmatprep.subr.bf16.mxu0 0
        %964 = vmatpush2.bf16.msra.mxu0 %v758
        %965 = vmatprep.subr.bf16.mxu0 0
        %966 = vmatpush2.bf16.msra.mxu0 %v757
        %967 = vmatprep.subr.bf16.mxu0 0
        %968 = vmatpush2.bf16.msra.mxu0 %v756
        %969 = vmatprep.subr.bf16.mxu0 0
        %970 = vmatpush2.bf16.msra.mxu0 %v755
        %971 = vmatprep.mubr.bf16.mxu0 %v432
        %972 = vmatmul.mubr.bf16.gmra.mxu0 %v431
        %v973 = vpop.f32.mrf.mxu0
        %v974 = vadd.f32 %v926, %v973
        %v975 = vpop.f32.mrf.mxu0
        %v976 = vpop.f32.mrf.mxu0
        %v977 = vadd.f32 %v929, %v976
        %v978 = vpop.f32.mrf.mxu0
        %979 = vmatprep.mubr.bf16.mxu0 %v440
        %980 = vmatmul.mubr.bf16.gmra.mxu0 %v439
        %v981 = vpop.f32.mrf.mxu0
        %v982 = vadd.f32 %v934, %v981
        %v983 = vpop.f32.mrf.mxu0
        %v984 = vpop.f32.mrf.mxu0
        %v985 = vpop.f32.mrf.mxu0
        %986 = vdwg.mxu0
        %987 = vmatprep.subr.bf16.mxu0 0
        %988 = vmatpush1.bf16.msra.mxu0 %v770
        %989 = vmatprep.subr.bf16.mxu0 0
        %990 = vmatpush1.bf16.msra.mxu0 %v769
        %991 = vmatprep.subr.bf16.mxu0 0
        %992 = vmatpush1.bf16.msra.mxu0 %v768
        %993 = vmatprep.subr.bf16.mxu0 0
        %994 = vmatpush1.bf16.msra.mxu0 %v767
        %995 = vmatprep.subr.bf16.mxu0 0
        %996 = vmatpush1.bf16.msra.mxu0 %v766
        %997 = vmatprep.subr.bf16.mxu0 0
        %998 = vmatpush1.bf16.msra.mxu0 %v765
        %999 = vmatprep.subr.bf16.mxu0 0
        %1000 = vmatpush1.bf16.msra.mxu0 %v764
        %1001 = vmatprep.subr.bf16.mxu0 0
        %1002 = vmatpush1.bf16.msra.mxu0 %v763
        %1003 = vmatprep.subr.bf16.mxu0 0
        %1004 = vmatpush2.bf16.msra.mxu0 %v778
        %1005 = vmatprep.subr.bf16.mxu0 0
        %1006 = vmatpush2.bf16.msra.mxu0 %v777
        %1007 = vmatprep.subr.bf16.mxu0 0
        %1008 = vmatpush2.bf16.msra.mxu0 %v776
        %1009 = vmatprep.subr.bf16.mxu0 0
        %1010 = vmatpush2.bf16.msra.mxu0 %v775
        %1011 = vmatprep.subr.bf16.mxu0 0
        %1012 = vmatpush2.bf16.msra.mxu0 %v774
        %1013 = vmatprep.subr.bf16.mxu0 0
        %1014 = vmatpush2.bf16.msra.mxu0 %v773
        %1015 = vmatprep.subr.bf16.mxu0 0
        %1016 = vmatpush2.bf16.msra.mxu0 %v772
        %1017 = vmatprep.subr.bf16.mxu0 0
        %1018 = vmatpush2.bf16.msra.mxu0 %v771
        %1019 = vmatprep.mubr.bf16.mxu0 %v434
        %1020 = vmatmul.mubr.bf16.gmra.mxu0 %v433
        %v1021 = vpop.f32.mrf.mxu0
        %v1022 = vadd.f32 %v974, %v1021
        %v1023 = vpop.f32.mrf.mxu0
        %v1024 = vpop.f32.mrf.mxu0
        %v1025 = vadd.f32 %v977, %v1024
        %v1026 = vpop.f32.mrf.mxu0
        %1027 = vmatprep.mubr.bf16.mxu0 %v442
        %1028 = vmatmul.mubr.bf16.gmra.mxu0 %v441
        %v1029 = vpop.f32.mrf.mxu0
        %v1030 = vadd.f32 %v982, %v1029
        %v1031 = vpop.f32.mrf.mxu0
        %v1032 = vpop.f32.mrf.mxu0
        %v1033 = vpop.f32.mrf.mxu0
        %1034 = vdwg.mxu0
        %v1035 = vmax.f32 %v1022, 0.0
        %v1036 = vmax.f32 %v1025, 0.0
        %v1037 = vmax.f32 %v1030, 0.0
        %1038 = vst [vmem:[%s237] sm:$0xff] %v1035
        %1039 = vst [vmem:[%s237 + $0x8] sm:$0xff] %v1036
        %1040 = vst [vmem:[%s237 + $0x10] sm:$0xff] %v1037
        %s1041 = sand.u32 %s121, 1
        %s1042 = scalar_lea.sflag [#allocation4], %s1041
        %s1043 = sand.u32 %s121, 1
        %s1044 = smul.addr %s1043, 24
        %s1045 = scalar_lea.vmem [#allocation7], %s1044
        // Predicated region
        $region41: #{tpu_custom_call.1} parent=31 // pred_check
          %p1046 = pneg %p131
        $region42: #{tpu_custom_call.1} parent=31 // pred_check_branch
          %1048 = sbr.rel (%p1046) target = $region44
        $region43: #{tpu_custom_call.1} parent=31 // pred_region
          %s1049 = smul.u32 3, %s25
          %s1051 = ssub.s32 384, 384
          %1052 = vsyncadd %s1042, %s1051
          %s1053 = smul.addr %s1049, 3
          %s1054 = sadd.s32 %s26, %s1053
          %s1055 = smul.addr %s1054, 128
          %s1056 = scalar_lea.hbm %s3, %s1055
          %s1057 = sshll.u32 %s1045, 4
          %s1058 = int_to_ptr.vmem [resolvable:$true] %s1057
          %1063 = dma.vmem_to_hbm [thread:$0]  %s1058, 384, %s1056, %s1042, 128, 384, 8
        $region44: #{tpu_custom_call.1} parent=31 // pred_fallthru
          _
      $region32: #{tpu_custom_call.1} parent=5 // pred_fallthru
        _
      %p1064 = scmp.le.s32.totalorder 2, %s16
      // Predicated region
      $region45: #{tpu_custom_call.1} parent=5 // pred_check
        %p1065 = pneg %p1064
      $region46: #{tpu_custom_call.1} parent=5 // pred_check_branch
        %1067 = sbr.rel (%p1065) target = $region48
      $region47: #{tpu_custom_call.1} parent=5 // pred_region
        %s1068 = ssub.s32 %s16, 2
        // Predicated region
        $region49: #{tpu_custom_call.1} parent=47 // pred_check
          %p1069 = pneg %p137
        $region50: #{tpu_custom_call.1} parent=47 // pred_check_branch
          %1071 = sbr.rel (%p1069) target = $region52
        $region51: #{tpu_custom_call.1} parent=47 // pred_region
          %s1072 = sand.u32 %s122, 1
          %s1073 = scalar_lea.sflag [#allocation4], %s1072
          %s1074 = sand.u32 %s122, 1
          %s1075 = smul.addr %s1074, 24
          %s1076 = scalar_lea.vmem [#allocation7], %s1075
          %1077 = dma.done %s1073, 384
        $region52: #{tpu_custom_call.1} parent=47 // pred_fallthru
          _
      $region48: #{tpu_custom_call.1} parent=5 // pred_fallthru
        _
    $region6: #{tpu_custom_call.1} parent=1 // loop_footer
      %s20 = sadd.s32 1, %s16
    $region7: #{tpu_custom_call.1} parent=1 // loop_footer_branch
      %15 = sbr.rel target = $region3
    $region8: #{tpu_custom_call.1} parent=1 // loop_exit
      _
    %1078 = vsyncpa [#allocation3], 1
    %s1079 = scalar_lea.sflag [#allocation3], 1
    %1080 = vsyncpa %s1079, 1
    %1081 = vsyncpa [#allocation6], 1
    %s1082 = scalar_lea.sflag [#allocation6], 1
    %1083 = vsyncpa %s1082, 1
    %1084 = vsyncpa [#allocation4], 1
    %s1085 = scalar_lea.sflag [#allocation4], 1
    %1086 = vsyncpa %s1085, 1

</llo_original>
